<compile_context>
chip_gen: v7x
topology: tpu7x:2x2x1
jax: 0.10.0
libtpu: 0.0.40
codegen_flags: <defaults>
</compile_context>

<pallas_src>
import math

import jax
import jax.numpy as jnp
from jax.experimental import pallas as pl
from jax.experimental.pallas import tpu as pltpu

HID_SIZE = 64
FUSED_HID = 2 * HID_SIZE  # 128: both heads share one lane-dense hidden layer


def _round_up(x, m):
    return ((x + m - 1) // m) * m


def _twinq_fused_kernel(obs_ref, act_ref,
                        w1o_ref, w1a_ref, b1_ref,
                        w2_ref, b2_ref,
                        w3_ref, b3_ref,
                        out_ref):
    """Both Q heads as one fused 3-layer MLP over a batch tile."""
    # Layer 1: concat([obs, act]) @ W1 == obs @ W1_obs + act @ W1_act.
    h = (jnp.dot(obs_ref[...], w1o_ref[...], preferred_element_type=jnp.float32)
         + jnp.dot(act_ref[...], w1a_ref[...], preferred_element_type=jnp.float32)
         + b1_ref[...])
    h = jnp.maximum(h, 0.0)
    # Layer 2: block-diagonal (128, 128) weight keeps the two heads independent.
    # Cast the activation back to the weight dtype so bf16 weights stay on the
    # MXU's native bf16 path (no-op on the f32 validation path).
    h = h.astype(w2_ref.dtype)
    h = jnp.dot(h, w2_ref[...], preferred_element_type=jnp.float32) + b2_ref[...]
    h = jnp.maximum(h, 0.0)
    # Layer 3: (128, 2) -> column 0 = q1, column 1 = q2.
    h = h.astype(w3_ref.dtype)
    out_ref[...] = (jnp.dot(h, w3_ref[...], preferred_element_type=jnp.float32)
                    + b3_ref[...])


def twin_q_forward(obs, act, fused_params, *, block_b=2048,
                   compute_dtype=jnp.bfloat16):
    """Pallas wrapper. fused_params = (w1_obs, w1_act, b1, w2, b2, w3, b3)."""
    w1o, w1a, b1, w2, b2, w3, b3 = fused_params
    B, obs_size = obs.shape
    act_size = act.shape[1]
    D = obs_size + act_size

    itemsize = jnp.dtype(compute_dtype).itemsize
    sub = 16 if itemsize < 4 else 8  # native sublane packing for the dtype

    # Balanced tiling: padding waste is at most (sub-1) rows per step.
    steps = pl.cdiv(B, block_b)
    # v7x has 2 TensorCores; give the "parallel" grid axis >=2 steps when B is
    # big enough that splitting does not produce tiny tiles (v5e/v6e unaffected).
    if steps == 1 and B >= 1024:
        steps = 2
    tb = _round_up(pl.cdiv(B, steps), sub)
    b_pad = steps * tb

    # Activations in the compute dtype (bf16 halves HBM read traffic).
    obs_c = obs.astype(compute_dtype)
    act_c = act.astype(compute_dtype)
    if b_pad != B:
        obs_c = jnp.pad(obs_c, ((0, b_pad - B), (0, 0)))
        act_c = jnp.pad(act_c, ((0, b_pad - B), (0, 0)))

    # Weights in the compute dtype; biases stay f32 (added post-accumulation).
    w1o_c = w1o.astype(compute_dtype)
    w1a_c = w1a.astype(compute_dtype)
    w2_c = w2.astype(compute_dtype)
    w3_c = w3.astype(compute_dtype)
    b1_c = b1.astype(jnp.float32)
    b2_c = b2.astype(jnp.float32)
    b3_c = b3.astype(jnp.float32)

    # --- cost estimate + VMEM sizing (lane dim pads to 128) ---
    def lane_pad(n):
        return _round_up(n, 128)

    flops = 2 * b_pad * (D * FUSED_HID + FUSED_HID * FUSED_HID + FUSED_HID * 2)
    bytes_accessed = int(
        itemsize * b_pad * (obs_size + act_size)          # activation reads
        + 4 * b_pad * 2                                    # output writes (f32)
        + itemsize * (D * FUSED_HID + FUSED_HID * FUSED_HID + FUSED_HID * 2)
        + 4 * (2 * FUSED_HID + 2))                         # biases

    # Streamed (double-buffered) tiles: obs, act (compute dtype) + out (f32).
    streamed_vmem = 2 * (tb * lane_pad(obs_size) * itemsize
                         + tb * lane_pad(act_size) * itemsize
                         + tb * lane_pad(2) * 4)
    weight_vmem = (itemsize * (_round_up(obs_size, sub) * FUSED_HID
                               + _round_up(act_size, sub) * FUSED_HID
                               + FUSED_HID * FUSED_HID
                               + FUSED_HID * lane_pad(2))
                   + 3 * 8 * 128 * 4)                      # padded biases
    vmem_limit = int(min(48 << 20,
                         max(32 << 20, 2 * (streamed_vmem + weight_vmem))))

    out = pl.pallas_call(
        _twinq_fused_kernel,
        out_shape=jax.ShapeDtypeStruct((b_pad, 2), jnp.float32),
        grid_spec=pltpu.PrefetchScalarGridSpec(
            num_scalar_prefetch=0,
            grid=(steps,),
            in_specs=[
                # batch-tiled activations
                pl.BlockSpec((tb, obs_size), lambda i: (i, 0)),
                pl.BlockSpec((tb, act_size), lambda i: (i, 0)),
                # weights / biases: constant index_map -> VMEM-resident
                pl.BlockSpec((obs_size, FUSED_HID), lambda i: (0, 0)),
                pl.BlockSpec((act_size, FUSED_HID), lambda i: (0, 0)),
                pl.BlockSpec((1, FUSED_HID), lambda i: (0, 0)),
                pl.BlockSpec((FUSED_HID, FUSED_HID), lambda i: (0, 0)),
                pl.BlockSpec((1, FUSED_HID), lambda i: (0, 0)),
                pl.BlockSpec((FUSED_HID, 2), lambda i: (0, 0)),
                pl.BlockSpec((1, 2), lambda i: (0, 0)),
            ],
            out_specs=pl.BlockSpec((tb, 2), lambda i: (i, 0)),
        ),
        compiler_params=pltpu.CompilerParams(
            dimension_semantics=("parallel",),
            vmem_limit_bytes=vmem_limit),
        cost_estimate=pl.CostEstimate(
            flops=flops, transcendentals=0, bytes_accessed=bytes_accessed),
    )(obs_c, act_c, w1o_c, w1a_c, b1_c, w2_c, b2_c, w3_c, b3_c)

    out = out[:B]
    return out[:, 0:1], out[:, 1:2]


# -------------------- parameter init / packing --------------------

def init_linear(key, fan_in, fan_out):
    """PyTorch nn.Linear default init: U(-1/sqrt(fan_in), 1/sqrt(fan_in)).

    Weight stored as (fan_in, fan_out) so the kernel does x @ W."""
    kw, kb = jax.random.split(key)
    bound = 1.0 / math.sqrt(fan_in)
    w = jax.random.uniform(kw, (fan_in, fan_out), jnp.float32, -bound, bound)
    b = jax.random.uniform(kb, (1, fan_out), jnp.float32, -bound, bound)
    return w, b


def init_params(key, obs_size, act_size):
    """Per-head parameters, exactly mirroring the PyTorch module."""
    in_dim = obs_size + act_size
    keys = jax.random.split(key, 6)
    w1a, b1a = init_linear(keys[0], in_dim, HID_SIZE)
    w2a, b2a = init_linear(keys[1], HID_SIZE, HID_SIZE)
    w3a, b3a = init_linear(keys[2], HID_SIZE, 1)
    w1b, b1b = init_linear(keys[3], in_dim, HID_SIZE)
    w2b, b2b = init_linear(keys[4], HID_SIZE, HID_SIZE)
    w3b, b3b = init_linear(keys[5], HID_SIZE, 1)
    return (w1a, b1a, w2a, b2a, w3a, b3a,
            w1b, b1b, w2b, b2b, w3b, b3b)


def fuse_params(params, obs_size):
    """Pack the 12 per-head arrays into the fused-kernel layout (f32)."""
    (w1a, b1a, w2a, b2a, w3a, b3a,
     w1b, b1b, w2b, b2b, w3b, b3b) = params
    w1 = jnp.concatenate([w1a, w1b], axis=1)                # (D, 128)
    w1_obs, w1_act = w1[:obs_size], w1[obs_size:]
    b1 = jnp.concatenate([b1a, b1b], axis=1)                # (1, 128)
    zero = jnp.zeros((HID_SIZE, HID_SIZE), jnp.float32)
    w2 = jnp.block([[w2a, zero], [zero, w2b]])              # (128, 128) block-diag
    b2 = jnp.concatenate([b2a, b2b], axis=1)                # (1, 128)
    zcol = jnp.zeros((HID_SIZE, 1), jnp.float32)
    w3 = jnp.block([[w3a, zcol], [zcol, w3b]])              # (128, 2) block-diag
    b3 = jnp.concatenate([b3a, b3b], axis=1)                # (1, 2)
    return (w1_obs, w1_act, b1, w2, b2, w3, b3)


# -------------------- pure-JAX reference --------------------

def reference_forward(obs, act, params):
    (w1a, b1a, w2a, b2a, w3a, b3a,
     w1b, b1b, w2b, b2b, w3b, b3b) = params
    x = jnp.concatenate([obs, act], axis=1)

    def mlp(w1, b1, w2, b2, w3, b3):
        h = jnp.maximum(x @ w1 + b1, 0.0)
        h = jnp.maximum(h @ w2 + b2, 0.0)
        return h @ w3 + b3

    return (mlp(w1a, b1a, w2a, b2a, w3a, b3a),
            mlp(w1b, b1b, w2b, b2b, w3b, b3b))


if __name__ == "__main__":
    B = 8
    OBS_SIZE = 24
    ACT_SIZE = 8

    key = jax.random.PRNGKey(0)
    k_obs, k_act, k_params = jax.random.split(key, 3)

    obs = jax.random.normal(k_obs, (B, OBS_SIZE), jnp.float32)
    act = jax.random.normal(k_act, (B, ACT_SIZE), jnp.float32)

    params = init_params(k_params, OBS_SIZE, ACT_SIZE)
    fused = fuse_params(params, OBS_SIZE)

    r1, r2 = reference_forward(obs, act, params)

    # f32 validation path: exact match against the pure-JAX reference.
    q1f, q2f = twin_q_forward(obs, act, fused, compute_dtype=jnp.float32)
    jax.block_until_ready((q1f, q2f))
    assert q1f.shape == (B, 1) and q2f.shape == (B, 1)
    assert jnp.allclose(q1f, r1, atol=1e-4, rtol=1e-4)
    assert jnp.allclose(q2f, r2, atol=1e-4, rtol=1e-4)

    # bf16 fast path (default): looser tolerance because inputs/weights are bf16.
    q1, q2 = twin_q_forward(obs, act, fused)
    jax.block_until_ready((q1, q2))
    assert q1.shape == (B, 1) and q2.shape == (B, 1)
    assert jnp.allclose(q1, r1, atol=3e-2, rtol=3e-2)
    assert jnp.allclose(q2, r2, atol=3e-2, rtol=3e-2)

    print("KERNEL_OK")
</pallas_src>

<mosaic_0001>
module attributes {stable_mosaic.version = 11 : i64} {
  func.func @_twinq_fused_kernel(%arg0: i32, %arg1: memref<8x24xf32, #tpu.memory_space<vmem>>, %arg2: memref<8x8xf32, #tpu.memory_space<vmem>>, %arg3: memref<24x128xf32, #tpu.memory_space<vmem>>, %arg4: memref<8x128xf32, #tpu.memory_space<vmem>>, %arg5: memref<1x128xf32, #tpu.memory_space<vmem>>, %arg6: memref<128x128xf32, #tpu.memory_space<vmem>>, %arg7: memref<1x128xf32, #tpu.memory_space<vmem>>, %arg8: memref<128x2xf32, #tpu.memory_space<vmem>>, %arg9: memref<1x2xf32, #tpu.memory_space<vmem>>, %arg10: memref<8x2xf32, #tpu.memory_space<vmem>>) attributes {dimension_semantics = [#tpu.dimension_semantics<parallel>], iteration_bounds = array<i64: 1>, scalar_prefetch = 0 : i64, scratch_operands = 0 : i64, tpu.core_type = #tpu.core_type<tc>, window_params = [{transform_indices = @transform_0, window_bounds = array<i64: 8, 24>}, {transform_indices = @transform_1, window_bounds = array<i64: 8, 8>}, {pipeline_mode = #tpu.pipeline_mode<synchronous>, transform_indices = @transform_2, window_bounds = array<i64: 24, 128>}, {pipeline_mode = #tpu.pipeline_mode<synchronous>, transform_indices = @transform_3, window_bounds = array<i64: 8, 128>}, {pipeline_mode = #tpu.pipeline_mode<synchronous>, transform_indices = @transform_4, window_bounds = array<i64: 1, 128>}, {pipeline_mode = #tpu.pipeline_mode<synchronous>, transform_indices = @transform_5, window_bounds = array<i64: 128, 128>}, {pipeline_mode = #tpu.pipeline_mode<synchronous>, transform_indices = @transform_6, window_bounds = array<i64: 1, 128>}, {pipeline_mode = #tpu.pipeline_mode<synchronous>, transform_indices = @transform_7, window_bounds = array<i64: 128, 2>}, {pipeline_mode = #tpu.pipeline_mode<synchronous>, transform_indices = @transform_8, window_bounds = array<i64: 1, 2>}, {transform_indices = @transform_9, window_bounds = array<i64: 8, 2>}]} {
    %c0 = arith.constant 0 : index
    %c0_0 = arith.constant 0 : index
    %0 = vector.load %arg1[%c0, %c0_0] : memref<8x24xf32, #tpu.memory_space<vmem>>, vector<8x24xf32>
    %c0_1 = arith.constant 0 : index
    %c0_2 = arith.constant 0 : index
    %1 = vector.load %arg3[%c0_1, %c0_2] : memref<24x128xf32, #tpu.memory_space<vmem>>, vector<24x128xf32>
    %cst = arith.constant dense<0.000000e+00> : vector<8x128xf32>
    %2 = tpu.matmul %0, %1, %cst {dimension_numbers = #tpu.dot_dimension_numbers<[1], [0], [0], [1], [0, 0, 1, 1], [], []>} : vector<8x24xf32>, vector<24x128xf32>, vector<8x128xf32> -> vector<8x128xf32>
    %c0_3 = arith.constant 0 : index
    %c0_4 = arith.constant 0 : index
    %3 = vector.load %arg2[%c0_3, %c0_4] : memref<8x8xf32, #tpu.memory_space<vmem>>, vector<8x8xf32>
    %c0_5 = arith.constant 0 : index
    %c0_6 = arith.constant 0 : index
    %4 = vector.load %arg4[%c0_5, %c0_6] : memref<8x128xf32, #tpu.memory_space<vmem>>, vector<8x128xf32>
    %cst_7 = arith.constant dense<0.000000e+00> : vector<8x128xf32>
    %5 = tpu.matmul %3, %4, %cst_7 {dimension_numbers = #tpu.dot_dimension_numbers<[1], [0], [0], [1], [0, 0, 1, 1], [], []>} : vector<8x8xf32>, vector<8x128xf32>, vector<8x128xf32> -> vector<8x128xf32>
    %6 = arith.addf %2, %5 : vector<8x128xf32>
    %c0_8 = arith.constant 0 : index
    %c0_9 = arith.constant 0 : index
    %7 = vector.load %arg5[%c0_8, %c0_9] : memref<1x128xf32, #tpu.memory_space<vmem>>, vector<1x128xf32>
    %8 = vector.broadcast %7 : vector<1x128xf32> to vector<8x128xf32>
    %9 = arith.addf %6, %8 : vector<8x128xf32>
    %cst_10 = arith.constant 0.000000e+00 : f32
    %10 = vector.broadcast %cst_10 : f32 to vector<8x128xf32>
    %11 = arith.maximumf %9, %10 : vector<8x128xf32>
    %c0_11 = arith.constant 0 : index
    %c0_12 = arith.constant 0 : index
    %12 = vector.load %arg6[%c0_11, %c0_12] : memref<128x128xf32, #tpu.memory_space<vmem>>, vector<128x128xf32>
    %cst_13 = arith.constant dense<0.000000e+00> : vector<8x128xf32>
    %13 = tpu.matmul %11, %12, %cst_13 {dimension_numbers = #tpu.dot_dimension_numbers<[1], [0], [0], [1], [0, 0, 1, 1], [], []>} : vector<8x128xf32>, vector<128x128xf32>, vector<8x128xf32> -> vector<8x128xf32>
    %c0_14 = arith.constant 0 : index
    %c0_15 = arith.constant 0 : index
    %14 = vector.load %arg7[%c0_14, %c0_15] : memref<1x128xf32, #tpu.memory_space<vmem>>, vector<1x128xf32>
    %15 = vector.broadcast %14 : vector<1x128xf32> to vector<8x128xf32>
    %16 = arith.addf %13, %15 : vector<8x128xf32>
    %cst_16 = arith.constant 0.000000e+00 : f32
    %17 = vector.broadcast %cst_16 : f32 to vector<8x128xf32>
    %18 = arith.maximumf %16, %17 : vector<8x128xf32>
    %c0_17 = arith.constant 0 : index
    %c0_18 = arith.constant 0 : index
    %19 = vector.load %arg8[%c0_17, %c0_18] : memref<128x2xf32, #tpu.memory_space<vmem>>, vector<128x2xf32>
    %cst_19 = arith.constant dense<0.000000e+00> : vector<8x2xf32>
    %20 = tpu.matmul %18, %19, %cst_19 {dimension_numbers = #tpu.dot_dimension_numbers<[1], [0], [0], [1], [0, 0, 1, 1], [], []>} : vector<8x128xf32>, vector<128x2xf32>, vector<8x2xf32> -> vector<8x2xf32>
    %c0_20 = arith.constant 0 : index
    %c0_21 = arith.constant 0 : index
    %21 = vector.load %arg9[%c0_20, %c0_21] : memref<1x2xf32, #tpu.memory_space<vmem>>, vector<1x2xf32>
    %22 = vector.broadcast %21 : vector<1x2xf32> to vector<8x2xf32>
    %23 = arith.addf %20, %22 : vector<8x2xf32>
    %c0_22 = arith.constant 0 : index
    %c0_23 = arith.constant 0 : index
    %24 = vector.load %arg10[%c0_22, %c0_23] : memref<8x2xf32, #tpu.memory_space<vmem>>, vector<8x2xf32>
    tpu.vector_store %arg10[%c0_22, %c0_23], %23 {strides = array<i32>} : memref<8x2xf32, #tpu.memory_space<vmem>>, vector<8x2xf32>,
    return
  }
  func.func @transform_0(%arg0: i32) -> (i32, i32) {
    %c0_i32 = arith.constant 0 : i32
    %c0_i32_0 = arith.constant 0 : i32
    return %arg0, %c0_i32 : i32, i32
  }
  func.func @transform_1(%arg0: i32) -> (i32, i32) {
    %c0_i32 = arith.constant 0 : i32
    %c0_i32_0 = arith.constant 0 : i32
    return %arg0, %c0_i32 : i32, i32
  }
  func.func @transform_2(%arg0: i32) -> (i32, i32) {
    %c0_i32 = arith.constant 0 : i32
    %c0_i32_0 = arith.constant 0 : i32
    %c0_i32_1 = arith.constant 0 : i32
    return %c0_i32, %c0_i32_0 : i32, i32
  }
  func.func @transform_3(%arg0: i32) -> (i32, i32) {
    %c0_i32 = arith.constant 0 : i32
    %c0_i32_0 = arith.constant 0 : i32
    %c0_i32_1 = arith.constant 0 : i32
    return %c0_i32, %c0_i32_0 : i32, i32
  }
  func.func @transform_4(%arg0: i32) -> (i32, i32) {
    %c0_i32 = arith.constant 0 : i32
    %c0_i32_0 = arith.constant 0 : i32
    %c0_i32_1 = arith.constant 0 : i32
    return %c0_i32, %c0_i32_0 : i32, i32
  }
  func.func @transform_5(%arg0: i32) -> (i32, i32) {
    %c0_i32 = arith.constant 0 : i32
    %c0_i32_0 = arith.constant 0 : i32
    %c0_i32_1 = arith.constant 0 : i32
    return %c0_i32, %c0_i32_0 : i32, i32
  }
  func.func @transform_6(%arg0: i32) -> (i32, i32) {
    %c0_i32 = arith.constant 0 : i32
    %c0_i32_0 = arith.constant 0 : i32
    %c0_i32_1 = arith.constant 0 : i32
    return %c0_i32, %c0_i32_0 : i32, i32
  }
  func.func @transform_7(%arg0: i32) -> (i32, i32) {
    %c0_i32 = arith.constant 0 : i32
    %c0_i32_0 = arith.constant 0 : i32
    %c0_i32_1 = arith.constant 0 : i32
    return %c0_i32, %c0_i32_0 : i32, i32
  }
  func.func @transform_8(%arg0: i32) -> (i32, i32) {
    %c0_i32 = arith.constant 0 : i32
    %c0_i32_0 = arith.constant 0 : i32
    %c0_i32_1 = arith.constant 0 : i32
    return %c0_i32, %c0_i32_0 : i32, i32
  }
  func.func @transform_9(%arg0: i32) -> (i32, i32) {
    %c0_i32 = arith.constant 0 : i32
    %c0_i32_0 = arith.constant 0 : i32
    return %arg0, %c0_i32 : i32, i32
  }
}

</mosaic_0001>

<llo_original>
// kernel: tpu_custom_call.1
$region0: #{tpu_custom_call.1}
  #allocation0 [shape = 'u32[]', space=smem, size = 0x4, offset = 0x4, fixed_abs, tag = 'smem constant byte address 0x4 - core index']
  #allocation1 [shape = 'u32[144,128]{1,0:T(1,128)}', space=vmem, size = 0x12000, scoped, tag = 'internal scratch']
  %s0 = inlined_call_operand.vmem [shape: f32[8,24], index: 0, kind: input, shape index: {}]
  %s1 = inlined_call_operand.vmem [shape: f32[8,8], index: 1, kind: input, shape index: {}]
  %s2 = inlined_call_operand.hbm [shape: f32[24,128], index: 2, kind: input, shape index: {}]
  %s3 = inlined_call_operand.hbm [shape: f32[8,128], index: 3, kind: input, shape index: {}]
  %s4 = inlined_call_operand.vmem [shape: f32[1,128], index: 4, kind: input, shape index: {}]
  %s5 = inlined_call_operand.vmem [shape: f32[128,128], index: 5, kind: input, shape index: {}]
  %s6 = inlined_call_operand.vmem [shape: f32[1,128], index: 6, kind: input, shape index: {}]
  %s7 = inlined_call_operand.vmem [shape: f32[128,2], index: 7, kind: input, shape index: {}]
  %s8 = inlined_call_operand.vmem [shape: f32[1,2], index: 8, kind: input, shape index: {}]
  %s9 = inlined_call_operand.vmem [shape: f32[8,2], index: 9, kind: output, shape index: {}]
  %s10 = sld [smem:[#allocation0]]
  $region54: #{tpu_custom_call.1} parent=0
    _
  %s12 = ssub.s32 1, %s10
  %s13 = scalar_select 0, %s12, %s10
  $region1: #{tpu_custom_call.1} parent=0
    #allocation2 [shape = 'u8[12288]{0}', space=vmem, size = 0x3000, scoped, tag = 'input window, operand 2, single buffered']
    #allocation3 [shape = 's32[1]{0}', space=sflag, size = 0x4, scoped, tag = 'scoped memory for tpu_custom_call.1']
    #allocation4 [shape = 'u8[4096]{0}', space=vmem, size = 0x1000, scoped, tag = 'input window, operand 3, single buffered']
    #allocation5 [shape = 's32[1]{0}', space=sflag, size = 0x4, scoped, tag = 'scoped memory for tpu_custom_call.1']
    %14 = vsyncpa [#allocation3], 0
    %15 = vsyncpa [#allocation5], 0
    // Predicated region
    $region2: #{tpu_custom_call.1} parent=1 // pred_check
      _
    $region3: #{tpu_custom_call.1} parent=1 // pred_check_branch
      %17 = sbr.rel (0) target = $region5
    $region4: #{tpu_custom_call.1} parent=1 // pred_region
      _
    $region5: #{tpu_custom_call.1} parent=1 // pred_fallthru
      _
    // Predicated region
    $region6: #{tpu_custom_call.1} parent=1 // pred_check
      _
    $region7: #{tpu_custom_call.1} parent=1 // pred_check_branch
      %19 = sbr.rel (0) target = $region9
    $region8: #{tpu_custom_call.1} parent=1 // pred_region
      _
    $region9: #{tpu_custom_call.1} parent=1 // pred_fallthru
      _
    // Predicated region
    $region10: #{tpu_custom_call.1} parent=1 // pred_check
      _
    $region11: #{tpu_custom_call.1} parent=1 // pred_check_branch
      %21 = sbr.rel (0) target = $region13
    $region12: #{tpu_custom_call.1} parent=1 // pred_region
      %s23 = ssub.s32 384, 384
      %24 = vsyncadd [#allocation3], %s23
      %s25 = sshll.u32 [#allocation2], 4
      %s26 = int_to_ptr.vmem [resolvable:$true] %s25
      %31 = dma.hbm_to_vmem [thread:$0]  %s2, 384, %s26, [#allocation3], 128, 128, 8
    $region13: #{tpu_custom_call.1} parent=1 // pred_fallthru
      _
    // Predicated region
    $region14: #{tpu_custom_call.1} parent=1 // pred_check
      _
    $region15: #{tpu_custom_call.1} parent=1 // pred_check_branch
      %33 = sbr.rel (0) target = $region17
    $region16: #{tpu_custom_call.1} parent=1 // pred_region
      %s35 = ssub.s32 128, 128
      %36 = vsyncadd [#allocation5], %s35
      %s38 = sshll.u32 [#allocation4], 4
      %s39 = int_to_ptr.vmem [resolvable:$true] %s38
      %41 = dma.hbm_to_vmem [thread:$0]  %s3, 128, %s39, [#allocation5]
    $region17: #{tpu_custom_call.1} parent=1 // pred_fallthru
      _
    // Predicated region
    $region18: #{tpu_custom_call.1} parent=1 // pred_check
      _
    $region19: #{tpu_custom_call.1} parent=1 // pred_check_branch
      %43 = sbr.rel (0) target = $region21
    $region20: #{tpu_custom_call.1} parent=1 // pred_region
      _
    $region21: #{tpu_custom_call.1} parent=1 // pred_fallthru
      _
    // Predicated region
    $region22: #{tpu_custom_call.1} parent=1 // pred_check
      _
    $region23: #{tpu_custom_call.1} parent=1 // pred_check_branch
      %45 = sbr.rel (0) target = $region25
    $region24: #{tpu_custom_call.1} parent=1 // pred_region
      _
    $region25: #{tpu_custom_call.1} parent=1 // pred_fallthru
      _
    // Predicated region
    $region26: #{tpu_custom_call.1} parent=1 // pred_check
      _
    $region27: #{tpu_custom_call.1} parent=1 // pred_check_branch
      %47 = sbr.rel (0) target = $region29
    $region28: #{tpu_custom_call.1} parent=1 // pred_region
      _
    $region29: #{tpu_custom_call.1} parent=1 // pred_fallthru
      _
    // Predicated region
    $region30: #{tpu_custom_call.1} parent=1 // pred_check
      _
    $region31: #{tpu_custom_call.1} parent=1 // pred_check_branch
      %49 = sbr.rel (0) target = $region33
    $region32: #{tpu_custom_call.1} parent=1 // pred_region
      _
    $region33: #{tpu_custom_call.1} parent=1 // pred_fallthru
      _
    // Predicated region
    $region34: #{tpu_custom_call.1} parent=1 // pred_check
      _
    $region35: #{tpu_custom_call.1} parent=1 // pred_check_branch
      %51 = sbr.rel (0) target = $region37
    $region36: #{tpu_custom_call.1} parent=1 // pred_region
      _
    $region37: #{tpu_custom_call.1} parent=1 // pred_fallthru
      _
    // Predicated region
    $region38: #{tpu_custom_call.1} parent=1 // pred_check
      _
    $region39: #{tpu_custom_call.1} parent=1 // pred_check_branch
      %53 = sbr.rel (0) target = $region41
    $region40: #{tpu_custom_call.1} parent=1 // pred_region
      %54 = dma.done [#allocation3], 384
    $region41: #{tpu_custom_call.1} parent=1 // pred_fallthru
      _
    // Predicated region
    $region42: #{tpu_custom_call.1} parent=1 // pred_check
      _
    $region43: #{tpu_custom_call.1} parent=1 // pred_check_branch
      %56 = sbr.rel (0) target = $region45
    $region44: #{tpu_custom_call.1} parent=1 // pred_region
      %57 = dma.done [#allocation5], 128
    $region45: #{tpu_custom_call.1} parent=1 // pred_fallthru
      _
    %v58 = vld [vmem:[%s0] sm:$0xff]
    %v59 = vld [vmem:[#allocation2] sm:$0xff]
    %v60 = vld [vmem:[#allocation2 + $0x8] sm:$0xff]
    %v61 = vld [vmem:[#allocation2 + $0x10] sm:$0xff]
    %v62 = vld [vmem:[%s1] sm:$0xff]
    %v63 = vld [vmem:[#allocation4] sm:$0xff]
    %vm64 = vcmask 64512
    %v66 = vsel %vm64, %v62, 0
    %68 = vmatprep.subr.mxu0 0.0
    %69 = vmatpush1.msra.mxu0 %v63
    %70 = vmatprep.subr.mxu0 0.0
    %71 = vmatpush1.msra.mxu0 0.0
    %72 = vmatprep.subr.mxu0 0.0
    %73 = vmatpush1.msra.mxu0 0.0
    %74 = vmatprep.subr.mxu0 0.0
    %75 = vmatpush1.msra.mxu0 0.0
    %76 = vmatprep.subr.mxu0 0.0
    %77 = vmatpush1.msra.mxu0 0.0
    %78 = vmatprep.subr.mxu0 0.0
    %79 = vmatpush1.msra.mxu0 0.0
    %80 = vmatprep.subr.mxu0 0.0
    %81 = vmatpush1.msra.mxu0 0.0
    %82 = vmatprep.subr.mxu0 0.0
    %83 = vmatpush1.msra.mxu0 0.0
    %84 = vmatprep.subr.mxu0 0.0
    %85 = vmatpush1.msra.mxu0 0.0
    %86 = vmatprep.subr.mxu0 0.0
    %87 = vmatpush1.msra.mxu0 0.0
    %88 = vmatprep.subr.mxu0 0.0
    %89 = vmatpush1.msra.mxu0 0.0
    %90 = vmatprep.subr.mxu0 0.0
    %91 = vmatpush1.msra.mxu0 0.0
    %92 = vmatprep.subr.mxu0 0.0
    %93 = vmatpush1.msra.mxu0 0.0
    %94 = vmatprep.subr.mxu0 0.0
    %95 = vmatpush1.msra.mxu0 0.0
    %96 = vmatprep.subr.mxu0 0.0
    %97 = vmatpush1.msra.mxu0 0.0
    %98 = vmatprep.subr.mxu0 0.0
    %99 = vmatpush1.msra.mxu0 0.0
    %100 = vmatprep.subr.mxu0 0.0
    %101 = vmatpush1.msra.mxu0 0.0
    %102 = vmatprep.subr.mxu0 0.0
    %103 = vmatpush1.msra.mxu0 0.0
    %104 = vmatprep.subr.mxu0 0.0
    %105 = vmatpush1.msra.mxu0 0.0
    %106 = vmatprep.subr.mxu0 0.0
    %107 = vmatpush1.msra.mxu0 0.0
    %108 = vmatprep.subr.mxu0 0.0
    %109 = vmatpush1.msra.mxu0 0.0
    %110 = vmatprep.subr.mxu0 0.0
    %111 = vmatpush1.msra.mxu0 0.0
    %112 = vmatprep.subr.mxu0 0.0
    %113 = vmatpush1.msra.mxu0 0.0
    %114 = vmatprep.subr.mxu0 0.0
    %115 = vmatpush1.msra.mxu0 0.0
    %116 = vmatprep.subr.mxu0 0.0
    %117 = vmatpush1.msra.mxu0 0.0
    %118 = vmatprep.subr.mxu0 0.0
    %119 = vmatpush1.msra.mxu0 0.0
    %120 = vmatprep.subr.mxu0 0.0
    %121 = vmatpush1.msra.mxu0 0.0
    %122 = vmatprep.subr.mxu0 0.0
    %123 = vmatpush1.msra.mxu0 0.0
    %124 = vmatprep.subr.mxu0 0.0
    %125 = vmatpush1.msra.mxu0 0.0
    %126 = vmatprep.subr.mxu0 0.0
    %127 = vmatpush1.msra.mxu0 0.0
    %128 = vmatprep.subr.mxu0 0.0
    %129 = vmatpush1.msra.mxu0 0.0
    %130 = vmatprep.subr.mxu0 0.0
    %131 = vmatpush1.msra.mxu0 0.0
    %132 = vmatprep.mubr.f32.mxu0 0.0
    %133 = vmatmul.mubr.f32.gmra.mrb[0].mxu0 %v66
    %v134 = vpop.f32.mrb[0].mxu0
    %v135 = vadd.f32 0.0, %v134
    %v136 = vpop.f32.mrb[0].mxu0
    %137 = vdwg.mxu0
    %vm138 = vcmask 195584
    %v140 = vsel %vm138, %v58, 0
    %142 = vmatprep.subr.mxu0 0.0
    %143 = vmatpush1.msra.mxu0 %v59
    %144 = vmatprep.subr.mxu0 0.0
    %145 = vmatpush1.msra.mxu0 %v60
    %146 = vmatprep.subr.mxu0 0.0
    %147 = vmatpush1.msra.mxu0 %v61
    %148 = vmatprep.subr.mxu0 0.0
    %149 = vmatpush1.msra.mxu0 0.0
    %150 = vmatprep.subr.mxu0 0.0
    %151 = vmatpush1.msra.mxu0 0.0
    %152 = vmatprep.subr.mxu0 0.0
    %153 = vmatpush1.msra.mxu0 0.0
    %154 = vmatprep.subr.mxu0 0.0
    %155 = vmatpush1.msra.mxu0 0.0
    %156 = vmatprep.subr.mxu0 0.0
    %157 = vmatpush1.msra.mxu0 0.0
    %158 = vmatprep.subr.mxu0 0.0
    %159 = vmatpush1.msra.mxu0 0.0
    %160 = vmatprep.subr.mxu0 0.0
    %161 = vmatpush1.msra.mxu0 0.0
    %162 = vmatprep.subr.mxu0 0.0
    %163 = vmatpush1.msra.mxu0 0.0
    %164 = vmatprep.subr.mxu0 0.0
    %165 = vmatpush1.msra.mxu0 0.0
    %166 = vmatprep.subr.mxu0 0.0
    %167 = vmatpush1.msra.mxu0 0.0
    %168 = vmatprep.subr.mxu0 0.0
    %169 = vmatpush1.msra.mxu0 0.0
    %170 = vmatprep.subr.mxu0 0.0
    %171 = vmatpush1.msra.mxu0 0.0
    %172 = vmatprep.subr.mxu0 0.0
    %173 = vmatpush1.msra.mxu0 0.0
    %174 = vmatprep.subr.mxu0 0.0
    %175 = vmatpush1.msra.mxu0 0.0
    %176 = vmatprep.subr.mxu0 0.0
    %177 = vmatpush1.msra.mxu0 0.0
    %178 = vmatprep.subr.mxu0 0.0
    %179 = vmatpush1.msra.mxu0 0.0
    %180 = vmatprep.subr.mxu0 0.0
    %181 = vmatpush1.msra.mxu0 0.0
    %182 = vmatprep.subr.mxu0 0.0
    %183 = vmatpush1.msra.mxu0 0.0
    %184 = vmatprep.subr.mxu0 0.0
    %185 = vmatpush1.msra.mxu0 0.0
    %186 = vmatprep.subr.mxu0 0.0
    %187 = vmatpush1.msra.mxu0 0.0
    %188 = vmatprep.subr.mxu0 0.0
    %189 = vmatpush1.msra.mxu0 0.0
    %190 = vmatprep.subr.mxu0 0.0
    %191 = vmatpush1.msra.mxu0 0.0
    %192 = vmatprep.subr.mxu0 0.0
    %193 = vmatpush1.msra.mxu0 0.0
    %194 = vmatprep.subr.mxu0 0.0
    %195 = vmatpush1.msra.mxu0 0.0
    %196 = vmatprep.subr.mxu0 0.0
    %197 = vmatpush1.msra.mxu0 0.0
    %198 = vmatprep.subr.mxu0 0.0
    %199 = vmatpush1.msra.mxu0 0.0
    %200 = vmatprep.subr.mxu0 0.0
    %201 = vmatpush1.msra.mxu0 0.0
    %202 = vmatprep.subr.mxu0 0.0
    %203 = vmatpush1.msra.mxu0 0.0
    %204 = vmatprep.subr.mxu0 0.0
    %205 = vmatpush1.msra.mxu0 0.0
    %206 = vmatprep.mubr.f32.mxu0 0.0
    %207 = vmatmul.mubr.f32.gmra.mrb[0].mxu0 %v140
    %v208 = vpop.f32.mrb[0].mxu0
    %v209 = vadd.f32 %v135, %v208
    %v210 = vpop.f32.mrb[0].mxu0
    %211 = vdwg.mxu0
    %v212 = vld [vmem:[%s4] sm:$0x1]
    %v214 = vlaneseq
    %v215 = vshrl.u32 %v214, 7
    %v216 = vsub.s32 0, %v215
    %v217 = vrot.slane %v212, %v216
    %v219 = vadd.f32 %v209, %v217
    %v220 = vmax.f32 %v219, 0.0
    %v221 = vld [vmem:[%s5] sm:$0xff]
    %v222 = vld [vmem:[%s5 + $0x8] sm:$0xff]
    %v223 = vld [vmem:[%s5 + $0x10] sm:$0xff]
    %v224 = vld [vmem:[%s5 + $0x18] sm:$0xff]
    %v225 = vld [vmem:[%s5 + $0x20] sm:$0xff]
    %v226 = vld [vmem:[%s5 + $0x28] sm:$0xff]
    %v227 = vld [vmem:[%s5 + $0x30] sm:$0xff]
    %v228 = vld [vmem:[%s5 + $0x38] sm:$0xff]
    %v229 = vld [vmem:[%s5 + $0x40] sm:$0xff]
    %v230 = vld [vmem:[%s5 + $0x48] sm:$0xff]
    %v231 = vld [vmem:[%s5 + $0x50] sm:$0xff]
    %v232 = vld [vmem:[%s5 + $0x58] sm:$0xff]
    %v233 = vld [vmem:[%s5 + $0x60] sm:$0xff]
    %v234 = vld [vmem:[%s5 + $0x68] sm:$0xff]
    %v235 = vld [vmem:[%s5 + $0x70] sm:$0xff]
    %v236 = vld [vmem:[%s5 + $0x78] sm:$0xff]
    %v237 = vld [vmem:[%s6] sm:$0x1]
    %v239 = vlaneseq
    %v240 = vshrl.u32 %v239, 7
    %v241 = vsub.s32 0, %v240
    %v242 = vrot.slane %v237, %v241
    %244 = vmatprep.subr.mxu0 0.0
    %245 = vmatpush1.msra.mxu0 %v221
    %246 = vmatprep.subr.mxu0 0.0
    %247 = vmatpush1.msra.mxu0 %v222
    %248 = vmatprep.subr.mxu0 0.0
    %249 = vmatpush1.msra.mxu0 %v223
    %250 = vmatprep.subr.mxu0 0.0
    %251 = vmatpush1.msra.mxu0 %v224
    %252 = vmatprep.subr.mxu0 0.0
    %253 = vmatpush1.msra.mxu0 %v225
    %254 = vmatprep.subr.mxu0 0.0
    %255 = vmatpush1.msra.mxu0 %v226
    %256 = vmatprep.subr.mxu0 0.0
    %257 = vmatpush1.msra.mxu0 %v227
    %258 = vmatprep.subr.mxu0 0.0
    %259 = vmatpush1.msra.mxu0 %v228
    %260 = vmatprep.subr.mxu0 0.0
    %261 = vmatpush1.msra.mxu0 %v229
    %262 = vmatprep.subr.mxu0 0.0
    %263 = vmatpush1.msra.mxu0 %v230
    %264 = vmatprep.subr.mxu0 0.0
    %265 = vmatpush1.msra.mxu0 %v231
    %266 = vmatprep.subr.mxu0 0.0
    %267 = vmatpush1.msra.mxu0 %v232
    %268 = vmatprep.subr.mxu0 0.0
    %269 = vmatpush1.msra.mxu0 %v233
    %270 = vmatprep.subr.mxu0 0.0
    %271 = vmatpush1.msra.mxu0 %v234
    %272 = vmatprep.subr.mxu0 0.0
    %273 = vmatpush1.msra.mxu0 %v235
    %274 = vmatprep.subr.mxu0 0.0
    %275 = vmatpush1.msra.mxu0 %v236
    %276 = vmatprep.subr.mxu0 0.0
    %277 = vmatpush1.msra.mxu0 0.0
    %278 = vmatprep.subr.mxu0 0.0
    %279 = vmatpush1.msra.mxu0 0.0
    %280 = vmatprep.subr.mxu0 0.0
    %281 = vmatpush1.msra.mxu0 0.0
    %282 = vmatprep.subr.mxu0 0.0
    %283 = vmatpush1.msra.mxu0 0.0
    %284 = vmatprep.subr.mxu0 0.0
    %285 = vmatpush1.msra.mxu0 0.0
    %286 = vmatprep.subr.mxu0 0.0
    %287 = vmatpush1.msra.mxu0 0.0
    %288 = vmatprep.subr.mxu0 0.0
    %289 = vmatpush1.msra.mxu0 0.0
    %290 = vmatprep.subr.mxu0 0.0
    %291 = vmatpush1.msra.mxu0 0.0
    %292 = vmatprep.subr.mxu0 0.0
    %293 = vmatpush1.msra.mxu0 0.0
    %294 = vmatprep.subr.mxu0 0.0
    %295 = vmatpush1.msra.mxu0 0.0
    %296 = vmatprep.subr.mxu0 0.0
    %297 = vmatpush1.msra.mxu0 0.0
    %298 = vmatprep.subr.mxu0 0.0
    %299 = vmatpush1.msra.mxu0 0.0
    %300 = vmatprep.subr.mxu0 0.0
    %301 = vmatpush1.msra.mxu0 0.0
    %302 = vmatprep.subr.mxu0 0.0
    %303 = vmatpush1.msra.mxu0 0.0
    %304 = vmatprep.subr.mxu0 0.0
    %305 = vmatpush1.msra.mxu0 0.0
    %306 = vmatprep.subr.mxu0 0.0
    %307 = vmatpush1.msra.mxu0 0.0
    %308 = vmatprep.mubr.f32.mxu0 0.0
    %309 = vmatmul.mubr.f32.gmra.mrb[0].mxu0 %v220
    %v310 = vpop.f32.mrb[0].mxu0
    %v311 = vadd.f32 %v242, %v310
    %v312 = vpop.f32.mrb[0].mxu0
    %313 = vdwg.mxu0
    %v314 = vmax.f32 %v311, 0.0
    %v315 = vld [vmem:[%s7] sm:$0xff]
    %v316 = vld [vmem:[%s7 + $0x8] sm:$0xff]
    %v317 = vld [vmem:[%s7 + $0x10] sm:$0xff]
    %v318 = vld [vmem:[%s7 + $0x18] sm:$0xff]
    %v319 = vld [vmem:[%s7 + $0x20] sm:$0xff]
    %v320 = vld [vmem:[%s7 + $0x28] sm:$0xff]
    %v321 = vld [vmem:[%s7 + $0x30] sm:$0xff]
    %v322 = vld [vmem:[%s7 + $0x38] sm:$0xff]
    %v323 = vld [vmem:[%s7 + $0x40] sm:$0xff]
    %v324 = vld [vmem:[%s7 + $0x48] sm:$0xff]
    %v325 = vld [vmem:[%s7 + $0x50] sm:$0xff]
    %v326 = vld [vmem:[%s7 + $0x58] sm:$0xff]
    %v327 = vld [vmem:[%s7 + $0x60] sm:$0xff]
    %v328 = vld [vmem:[%s7 + $0x68] sm:$0xff]
    %v329 = vld [vmem:[%s7 + $0x70] sm:$0xff]
    %v330 = vld [vmem:[%s7 + $0x78] sm:$0xff]
    %v331 = vld [vmem:[%s8] sm:$0x1]
    %v333 = vlaneseq
    %v334 = vshrl.u32 %v333, 7
    %v335 = vsub.s32 0, %v334
    %v336 = vrot.slane %v331, %v335
    %338 = vmatprep.subr.mxu0 0.0
    %339 = vmatpush1.msra.mxu0 %v315
    %340 = vmatprep.subr.mxu0 0.0
    %341 = vmatpush1.msra.mxu0 %v316
    %342 = vmatprep.subr.mxu0 0.0
    %343 = vmatpush1.msra.mxu0 %v317
    %344 = vmatprep.subr.mxu0 0.0
    %345 = vmatpush1.msra.mxu0 %v318
    %346 = vmatprep.subr.mxu0 0.0
    %347 = vmatpush1.msra.mxu0 %v319
    %348 = vmatprep.subr.mxu0 0.0
    %349 = vmatpush1.msra.mxu0 %v320
    %350 = vmatprep.subr.mxu0 0.0
    %351 = vmatpush1.msra.mxu0 %v321
    %352 = vmatprep.subr.mxu0 0.0
    %353 = vmatpush1.msra.mxu0 %v322
    %354 = vmatprep.subr.mxu0 0.0
    %355 = vmatpush1.msra.mxu0 %v323
    %356 = vmatprep.subr.mxu0 0.0
    %357 = vmatpush1.msra.mxu0 %v324
    %358 = vmatprep.subr.mxu0 0.0
    %359 = vmatpush1.msra.mxu0 %v325
    %360 = vmatprep.subr.mxu0 0.0
    %361 = vmatpush1.msra.mxu0 %v326
    %362 = vmatprep.subr.mxu0 0.0
    %363 = vmatpush1.msra.mxu0 %v327
    %364 = vmatprep.subr.mxu0 0.0
    %365 = vmatpush1.msra.mxu0 %v328
    %366 = vmatprep.subr.mxu0 0.0
    %367 = vmatpush1.msra.mxu0 %v329
    %368 = vmatprep.subr.mxu0 0.0
    %369 = vmatpush1.msra.mxu0 %v330
    %370 = vmatprep.subr.mxu0 0.0
    %371 = vmatpush1.msra.mxu0 0.0
    %372 = vmatprep.subr.mxu0 0.0
    %373 = vmatpush1.msra.mxu0 0.0
    %374 = vmatprep.subr.mxu0 0.0
    %375 = vmatpush1.msra.mxu0 0.0
    %376 = vmatprep.subr.mxu0 0.0
    %377 = vmatpush1.msra.mxu0 0.0
    %378 = vmatprep.subr.mxu0 0.0
    %379 = vmatpush1.msra.mxu0 0.0
    %380 = vmatprep.subr.mxu0 0.0
    %381 = vmatpush1.msra.mxu0 0.0
    %382 = vmatprep.subr.mxu0 0.0
    %383 = vmatpush1.msra.mxu0 0.0
    %384 = vmatprep.subr.mxu0 0.0
    %385 = vmatpush1.msra.mxu0 0.0
    %386 = vmatprep.subr.mxu0 0.0
    %387 = vmatpush1.msra.mxu0 0.0
    %388 = vmatprep.subr.mxu0 0.0
    %389 = vmatpush1.msra.mxu0 0.0
    %390 = vmatprep.subr.mxu0 0.0
    %391 = vmatpush1.msra.mxu0 0.0
    %392 = vmatprep.subr.mxu0 0.0
    %393 = vmatpush1.msra.mxu0 0.0
    %394 = vmatprep.subr.mxu0 0.0
    %395 = vmatpush1.msra.mxu0 0.0
    %396 = vmatprep.subr.mxu0 0.0
    %397 = vmatpush1.msra.mxu0 0.0
    %398 = vmatprep.subr.mxu0 0.0
    %399 = vmatpush1.msra.mxu0 0.0
    %400 = vmatprep.subr.mxu0 0.0
    %401 = vmatpush1.msra.mxu0 0.0
    %402 = vmatprep.mubr.f32.mxu0 0.0
    %403 = vmatmul.mubr.f32.gmra.mrb[0].mxu0 %v314
    %v404 = vpop.f32.mrb[0].mxu0
    %v405 = vadd.f32 %v336, %v404
    %v406 = vpop.f32.mrb[0].mxu0
    %407 = vdwg.mxu0
    %vm408 = vcmask 15360
    %409 = vst.msk [vmem:[%s9] sm:$0xff] %vm408, %v405
    // Predicated region
    $region46: #{tpu_custom_call.1} parent=1 // pred_check
      _
    $region47: #{tpu_custom_call.1} parent=1 // pred_check_branch
      %411 = sbr.rel (0) target = $region49
    $region48: #{tpu_custom_call.1} parent=1 // pred_region
      _
    $region49: #{tpu_custom_call.1} parent=1 // pred_fallthru
      _
    // Predicated region
    $region50: #{tpu_custom_call.1} parent=1 // pred_check
      _
    $region51: #{tpu_custom_call.1} parent=1 // pred_check_branch
      %413 = sbr.rel (0) target = $region53
    $region52: #{tpu_custom_call.1} parent=1 // pred_region
      _
    $region53: #{tpu_custom_call.1} parent=1 // pred_fallthru
      _
    %414 = vsyncpa [#allocation3], 1
    %415 = vsyncpa [#allocation5], 1

</llo_original>
